<compile_context>
chip_gen: v6e
topology: v6e:2x2x1
jax: 0.10.0
libtpu: 0.0.40
codegen_flags: <defaults>
</compile_context>

<pallas_src>
import jax
import jax.numpy as jnp
from jax import lax
from jax.experimental import pallas as pl
from jax.experimental.pallas import tpu as pltpu

_I32_MIN = int(jnp.iinfo(jnp.int32).min)


# ---------------------------------------------------------------------------
# Kernel 1a: logits + softmax-over-experts, full-D (preferred path)
# ---------------------------------------------------------------------------
def _scores_fulld_kernel(x_ref, w_ref, scores_ref):
    """x_ref: [S_TILE, D], w_ref: [E, D] (same dtype, bf16 or f32),
    scores_ref (out): [E, S_TILE] f32 softmax over experts."""
    logits = lax.dot_general(
        w_ref[...], x_ref[...], (((1,), (1,)), ((), ())),
        preferred_element_type=jnp.float32)                     # [E, S_TILE]
    m = jnp.max(logits, axis=0, keepdims=True)                  # over experts
    e = jnp.exp(logits - m)
    scores_ref[...] = e / jnp.sum(e, axis=0, keepdims=True)     # exact divide


# ---------------------------------------------------------------------------
# Kernel 1b: tiled-D fallback (only when a full-D x tile would not fit VMEM)
# ---------------------------------------------------------------------------
def _scores_tiled_kernel(x_ref, w_ref, scores_ref, acc_ref):
    """x_ref: [S_TILE, D_TILE], w_ref: [E, D_TILE],
    scores_ref (out): [E, S_TILE] f32, acc_ref (scratch): [E, S_TILE] f32."""
    d = pl.program_id(1)

    @pl.when(d == 0)
    def _init():
        acc_ref[...] = jnp.zeros_like(acc_ref)

    acc_ref[...] += lax.dot_general(
        w_ref[...], x_ref[...], (((1,), (1,)), ((), ())),
        preferred_element_type=jnp.float32)

    @pl.when(d == pl.num_programs(1) - 1)
    def _finalize():
        logits = acc_ref[...]
        m = jnp.max(logits, axis=0, keepdims=True)
        e = jnp.exp(logits - m)
        scores_ref[...] = e / jnp.sum(e, axis=0, keepdims=True)


# ---------------------------------------------------------------------------
# Kernel 2: per-expert top-k over tokens (packed-key iterative argmax)
# ---------------------------------------------------------------------------
def _topk_kernel(scores_ref, gat_ref, idx_ref, keys_ref):
    """scores_ref: [E_BLK, S] f32 softmax scores (>= 0),
    gat_ref: [E_BLK, K] f32, idx_ref: [E_BLK, K] i32,
    keys_ref (scratch): [E_BLK, S] i32 packed sort keys."""
    E_BLK, S = scores_ref.shape
    K = gat_ref.shape[1]

    # Bits reserved in each key for the token id (tie-break + uniqueness).
    tb = max((S - 1).bit_length(), 1)
    tok_mask = (1 << tb) - 1
    hi_mask = jnp.int32(~tok_mask)

    tok = lax.broadcasted_iota(jnp.int32, (E_BLK, S), 1)   # token id per lane
    col = lax.broadcasted_iota(jnp.int32, (E_BLK, K), 1)   # output column id

    # Softmax scores are >= 0, so their f32 bit patterns are monotone as int32.
    # Pack (score bits with low `tb` bits cleared) | (S-1-token) into one int32
    # key: a single cross-lane max then yields both the winning value and its
    # token (ties break toward the smaller token id, matching the previous
    # behaviour), and keys are unique so the knockout removes exactly one token
    # per expert per step.  Clearing the low bits truncates the returned gating
    # values by < 2**(tb-23) relative (~3e-5 at S=256) -- negligible for a
    # router; indices are exact.
    sbits = pltpu.bitcast(scores_ref[...], jnp.int32)
    keys_ref[...] = (sbits & hi_mask) | ((S - 1) - tok)

    # K iterative argmax steps: per step one load sweep, one cross-lane max,
    # one knockout store sweep, plus two tiny masked column stores (no
    # full-[E,K] read-modify-write, no separate value/index reductions).
    # TODO(synk): for very large K, a ~32-step binary search over the key bits
    # plus one compaction pass (or per-S-tile partial top-k fused into kernel
    # 1's finalize) would replace the K knockout sweeps.
    @pl.loop(0, K)
    def _step(k):
        keys = keys_ref[...]
        kmax = jnp.max(keys, axis=1, keepdims=True)              # [E_BLK, 1]
        val = pltpu.bitcast(kmax & hi_mask, jnp.float32)         # truncated score
        sel = (S - 1) - (kmax & tok_mask)                        # token index
        onecol = col == k
        pltpu.store(gat_ref, jnp.broadcast_to(val, (E_BLK, K)), mask=onecol)
        pltpu.store(idx_ref, jnp.broadcast_to(sel, (E_BLK, K)), mask=onecol)
        # Knock out exactly the selected token (keys are unique per expert);
        # INT32_MIN sits below every remaining key (all keys are >= 0).
        keys_ref[...] = jnp.where(keys == kmax, _I32_MIN, keys)


# ---------------------------------------------------------------------------
# Wrapper helpers
# ---------------------------------------------------------------------------
def _tile_candidates(dim, granule=128):
    """Multiples of `granule` dividing `dim` (plus `dim` itself), descending."""
    cands = {dim}
    for t in range(granule, dim + 1, granule):
        if dim % t == 0:
            cands.add(t)
    return sorted(cands, reverse=True)


def _vmem_limit_bytes():
    """Per-generation scoped-VMEM limit: ~75% of physical VMEM, capped at
    96 MiB (=> ~96 MiB on v5e/v6e's 128 MiB, ~48 MiB on v7x's 64 MiB)."""
    phys = 64 * 1024 * 1024
    try:
        phys = int(pltpu.get_tpu_info().vmem_capacity_bytes)
    except Exception:
        pass
    return min((phys * 3) // 4, 96 * 1024 * 1024)


def _choose_tiles(S, D, E, x_itemsize, w_itemsize, vmem_limit, s_target=2048):
    """Pick (S_TILE, D_TILE).  Prefer full D (single-pass kernel, no reduction
    grid axis); S_TILE as large as the VMEM budget allows, but at least two S
    tiles when S >= 256 so v7x's two TensorCores both get work."""
    budget = int(vmem_limit * 0.85)   # headroom for Mosaic internal scratch

    def est(st, dt):                  # double-buffered x + w blocks + out blocks
        return 2 * st * dt * x_itemsize + 2 * E * dt * w_itemsize + 2 * E * st * 4

    s_cands = _tile_candidates(S)
    cap = min(s_target, S // 2) if S >= 256 else s_target
    capped = [t for t in s_cands if t <= cap]
    s_cands = capped if capped else [min(s_cands)]

    for st in s_cands:                # descending: biggest tile that fits wins
        if est(st, D) <= budget:
            return st, D
    st = s_cands[-1]
    for dt in _tile_candidates(D):
        if est(st, dt) <= budget:
            return st, dt
    return st, min(_tile_candidates(D))


# ---------------------------------------------------------------------------
# Wrapper
# ---------------------------------------------------------------------------
def router_forward(x, wg_weight, capacity_factor=1.0):
    """Expert-choice Router forward.

    x:         [S, D] tokens (bf16 or f32)
    wg_weight: [E, D] float32 gate weight (torch Linear, no bias)
    returns    (l_aux=0.0, gatings [E, K] f32, indices [E, K] i32)
    """
    S, D = x.shape
    E, D2 = wg_weight.shape
    assert D == D2
    K = int(S * capacity_factor / E)
    assert 1 <= K <= S, f"k={K} must be in [1, {S}] (check capacity_factor)"

    # Native single-pass MXU matmul: run the gate in the activation dtype
    # (bf16 x bf16 -> f32 accumulate when x is bf16).  The module's reference
    # math is f32; the only extra quantization vs `input.float() @ w.T` is the
    # bf16 rounding of the gate weight (~1e-3 relative on the logits), and the
    # change removes the per-tile f32 upcast copy that ate VMEM headroom.
    if x.dtype == jnp.bfloat16:
        w = wg_weight.astype(jnp.bfloat16)
    else:
        x = x.astype(jnp.float32)
        w = wg_weight.astype(jnp.float32)

    vmem_limit = _vmem_limit_bytes()
    S_TILE, D_TILE = _choose_tiles(S, D, E, x.dtype.itemsize, w.dtype.itemsize,
                                   vmem_limit)
    n_s = S // S_TILE

    # Phase 1: scores[E, S] = softmax_over_experts(x @ w.T).T
    if D_TILE == D:
        scores = pl.pallas_call(
            _scores_fulld_kernel,
            grid=(n_s,),
            in_specs=[
                pl.BlockSpec((S_TILE, D), lambda s: (s, 0)),
                pl.BlockSpec((E, D), lambda s: (0, 0)),
            ],
            out_specs=pl.BlockSpec((E, S_TILE), lambda s: (0, s)),
            out_shape=jax.ShapeDtypeStruct((E, S), jnp.float32),
            compiler_params=pltpu.CompilerParams(
                dimension_semantics=("parallel",),
                vmem_limit_bytes=vmem_limit),
        )(x, w)
    else:
        # Fallback when a full-D x tile does not fit VMEM: tiled reduction with
        # a resident [E, S_TILE] accumulator (D axis innermost, "arbitrary").
        n_d = D // D_TILE
        scores = pl.pallas_call(
            _scores_tiled_kernel,
            grid=(n_s, n_d),
            in_specs=[
                pl.BlockSpec((S_TILE, D_TILE), lambda s, d: (s, d)),
                pl.BlockSpec((E, D_TILE), lambda s, d: (0, d)),
            ],
            out_specs=pl.BlockSpec((E, S_TILE), lambda s, d: (0, s)),
            out_shape=jax.ShapeDtypeStruct((E, S), jnp.float32),
            scratch_shapes=[pltpu.VMEM((E, S_TILE), jnp.float32)],
            compiler_params=pltpu.CompilerParams(
                dimension_semantics=("parallel", "arbitrary"),
                vmem_limit_bytes=vmem_limit),
        )(x, w)

    # Phase 2: per-expert top-k.  Split experts into two "parallel" row blocks
    # when the (8,128) sublane tiling allows it, so v7x's two TensorCores both
    # work; on v5e/v6e the extra grid step is ~0.35 us, negligible vs the
    # K-step selection loop.
    n_e = 2 if (E % 2 == 0 and (E // 2) % 8 == 0) else 1
    e_blk = E // n_e
    gatings, indices = pl.pallas_call(
        _topk_kernel,
        grid=(n_e,),
        in_specs=[pl.BlockSpec((e_blk, S), lambda e: (e, 0))],
        out_specs=[
            pl.BlockSpec((e_blk, K), lambda e: (e, 0)),
            pl.BlockSpec((e_blk, K), lambda e: (e, 0)),
        ],
        out_shape=(
            jax.ShapeDtypeStruct((E, K), jnp.float32),
            jax.ShapeDtypeStruct((E, K), jnp.int32),
        ),
        scratch_shapes=[pltpu.VMEM((e_blk, S), jnp.int32)],
        compiler_params=pltpu.CompilerParams(
            dimension_semantics=("parallel",),
            vmem_limit_bytes=vmem_limit),
    )(scores)

    # TODO(synk): only router_type='expert_choice' is implemented; the
    # top1/top2 gating paths (gumbel noise, RTS uniform sampling, capacity
    # dropping, torch.distributed all_reduce) have no clean Pallas equivalent.
    return 0.0, gatings, indices


def _reference(x, wg_weight, capacity_factor=1.0):
    """Pure-JAX reference mirroring expert_choice(): f32 logits, softmax over
    experts, transpose, per-expert top-k."""
    logits = x.astype(jnp.float32) @ wg_weight.astype(jnp.float32).T
    scores = jax.nn.softmax(logits, axis=1).T                 # [E, S]
    S = x.shape[0]
    E = wg_weight.shape[0]
    K = int(S * capacity_factor / E)
    vals, idxs = lax.top_k(scores, K)
    return scores, vals, idxs


if __name__ == "__main__":
    # Small shapes consistent with the module: S tokens, model_dim D, E experts.
    # S=256 gives two 128-wide S tiles (exercises the parallel S grid), full D.
    S, D, E = 256, 256, 8
    capacity_factor = 1.0

    key = jax.random.PRNGKey(0)
    kx, kw = jax.random.split(key)
    x = jax.random.normal(kx, (S, D), dtype=jnp.bfloat16)
    # torch.nn.Linear default init: U(-1/sqrt(D), 1/sqrt(D)), float32.
    bound = 1.0 / (D ** 0.5)
    wg_weight = jax.random.uniform(
        kw, (E, D), dtype=jnp.float32, minval=-bound, maxval=bound)

    l_aux, gatings, indices = router_forward(x, wg_weight, capacity_factor)
    gatings = jax.block_until_ready(gatings)
    indices = jax.block_until_ready(indices)

    K = int(S * capacity_factor / E)
    assert gatings.shape == (E, K) and indices.shape == (E, K)
    assert indices.dtype == jnp.int32
    assert bool(jnp.all((indices >= 0) & (indices < S)))

    # (1) Tight check against a reference that uses the same bf16-rounded gate
    # weight the kernel uses (isolates kernel math: matmul, softmax, top-k).
    w_bf16 = wg_weight.astype(jnp.bfloat16)
    ref_scores_k, ref_vals_k, _ = _reference(x, w_bf16, capacity_factor)
    assert jnp.allclose(gatings, ref_vals_k, atol=1e-3, rtol=1e-3)
    gathered = jnp.take_along_axis(ref_scores_k, indices, axis=1)
    assert jnp.allclose(gatings, gathered, atol=1e-3, rtol=1e-3)

    # (2) Looser check against the module's exact f32 semantics
    # (input.float() @ w_f32.T): the tolerance absorbs the deliberate bf16
    # quantization of the gate weight (~1e-3 relative on logits) plus possible
    # near-tie reorderings it induces.  Indices may also differ from torch.topk
    # on exact ties (ties break toward the smaller token index here).
    _, ref_vals_f32, _ = _reference(x, wg_weight, capacity_factor)
    assert jnp.allclose(gatings, ref_vals_f32, atol=5e-3, rtol=1e-2)

    print("KERNEL_OK")
</pallas_src>

<mosaic_0001>
module attributes {stable_mosaic.version = 11 : i64} {
  func.func @_scores_fulld_kernel(%arg0: i32, %arg1: memref<128x256xbf16, #tpu.memory_space<vmem>>, %arg2: memref<8x256xbf16, #tpu.memory_space<vmem>>, %arg3: memref<8x128xf32, #tpu.memory_space<vmem>>) attributes {dimension_semantics = [#tpu.dimension_semantics<parallel>], iteration_bounds = array<i64: 2>, scalar_prefetch = 0 : i64, scratch_operands = 0 : i64, tpu.core_type = #tpu.core_type<tc>, window_params = [{transform_indices = @transform_0, window_bounds = array<i64: 128, 256>}, {pipeline_mode = #tpu.pipeline_mode<synchronous>, transform_indices = @transform_1, window_bounds = array<i64: 8, 256>}, {transform_indices = @transform_2, window_bounds = array<i64: 8, 128>}]} {
    %c0 = arith.constant 0 : index
    %c0_0 = arith.constant 0 : index
    %0 = vector.load %arg2[%c0, %c0_0] : memref<8x256xbf16, #tpu.memory_space<vmem>>, vector<8x256xbf16>
    %c0_1 = arith.constant 0 : index
    %c0_2 = arith.constant 0 : index
    %1 = vector.load %arg1[%c0_1, %c0_2] : memref<128x256xbf16, #tpu.memory_space<vmem>>, vector<128x256xbf16>
    %cst = arith.constant dense<0.000000e+00> : vector<8x128xf32>
    %2 = tpu.matmul %0, %1, %cst {dimension_numbers = #tpu.dot_dimension_numbers<[1], [1], [0], [0], [0, 0, 1, 0], [], []>} : vector<8x256xbf16>, vector<128x256xbf16>, vector<8x128xf32> -> vector<8x128xf32>
    %cst_3 = arith.constant dense<0xFF800000> : vector<128xf32>
    %3 = vector.multi_reduction <maximumf>, %2, %cst_3 [0] : vector<8x128xf32> to vector<128xf32>
    %4 = vector.shape_cast %3 : vector<128xf32> to vector<1x128xf32>
    %5 = vector.broadcast %4 : vector<1x128xf32> to vector<8x128xf32>
    %6 = arith.subf %2, %5 : vector<8x128xf32>
    %7 = math.exp %6 : vector<8x128xf32>
    %cst_4 = arith.constant dense<0.000000e+00> : vector<128xf32>
    %8 = vector.multi_reduction <add>, %7, %cst_4 [0] : vector<8x128xf32> to vector<128xf32>
    %9 = vector.shape_cast %8 : vector<128xf32> to vector<1x128xf32>
    %10 = vector.broadcast %9 : vector<1x128xf32> to vector<8x128xf32>
    %11 = arith.divf %7, %10 : vector<8x128xf32>
    %c0_5 = arith.constant 0 : index
    %c0_6 = arith.constant 0 : index
    %12 = vector.load %arg3[%c0_5, %c0_6] : memref<8x128xf32, #tpu.memory_space<vmem>>, vector<8x128xf32>
    tpu.vector_store %arg3[%c0_5, %c0_6], %11 {strides = array<i32>} : memref<8x128xf32, #tpu.memory_space<vmem>>, vector<8x128xf32>,
    return
  }
  func.func @transform_0(%arg0: i32) -> (i32, i32) {
    %c0_i32 = arith.constant 0 : i32
    %c0_i32_0 = arith.constant 0 : i32
    return %arg0, %c0_i32 : i32, i32
  }
  func.func @transform_1(%arg0: i32) -> (i32, i32) {
    %c0_i32 = arith.constant 0 : i32
    %c0_i32_0 = arith.constant 0 : i32
    %c0_i32_1 = arith.constant 0 : i32
    return %c0_i32, %c0_i32_0 : i32, i32
  }
  func.func @transform_2(%arg0: i32) -> (i32, i32) {
    %c0_i32 = arith.constant 0 : i32
    %c0_i32_0 = arith.constant 0 : i32
    return %c0_i32, %arg0 : i32, i32
  }
}

</mosaic_0001>

<llo_original>
// kernel: tpu_custom_call.1
$region0: #{tpu_custom_call.1}
  #allocation0 [shape = 'u32[]', space=smem, size = 0x4, offset = 0x4, fixed_abs, tag = 'smem constant byte address 0x4 - core index']
  #allocation1 [shape = 'u32[144,128]{1,0:T(1,128)}', space=vmem, size = 0x12000, scoped, tag = 'internal scratch']
  %s0 = inlined_call_operand.hbm [shape: bf16[256,256], index: 0, kind: input, shape index: {}]
  %s1 = inlined_call_operand.hbm [shape: bf16[8,256], index: 1, kind: input, shape index: {}]
  %s2 = inlined_call_operand.hbm [shape: f32[8,256], index: 2, kind: output, shape index: {}]
  %s3 = sld [smem:[#allocation0]]
  $region49: #{tpu_custom_call.1} parent=0
    _
  %s5 = ssub.s32 1, %s3
  %s6 = scalar_select 0, %s5, %s3
  $region1: #{tpu_custom_call.1} parent=0
    #allocation2 [shape = 'u8[131072]{0}', space=vmem, size = 0x20000, scoped, tag = 'input window, operand 0']
    #allocation3 [shape = 's32[2]{0}', space=sflag, size = 0x8, scoped, tag = 'scoped memory for tpu_custom_call.1']
    #allocation4 [shape = 's32[2]{0}', space=sflag, size = 0x8, scoped, tag = 'scoped memory for tpu_custom_call.1']
    #allocation5 [shape = 'u8[4096]{0}', space=vmem, size = 0x1000, scoped, tag = 'input window, operand 1, single buffered']
    #allocation6 [shape = 's32[1]{0}', space=sflag, size = 0x4, scoped, tag = 'scoped memory for tpu_custom_call.1']
    #allocation7 [shape = 'u8[8192]{0}', space=vmem, size = 0x2000, scoped, tag = 'output window, operand 0']
    %7 = vsyncpa [#allocation3], 0
    %s8 = scalar_lea.sflag [#allocation3], 1
    %9 = vsyncpa %s8, 0
    %10 = vsyncpa [#allocation6], 0
    %11 = vsyncpa [#allocation4], 0
    %s12 = scalar_lea.sflag [#allocation4], 1
    %13 = vsyncpa %s12, 0
    loop: start=0, step=1, limit=4
    $region2: #{tpu_custom_call.1} parent=1 // loop_pre_header
      _
    $region3: #{tpu_custom_call.1} parent=1 // loop_header
      %s15 = sphi 0, %s19
      %p16 = scmp.ge.s32.totalorder %s15, 4
      %s25 = sphi 0, %s27
      %s28 = sphi 0, %s25
      %s29 = sphi 0, %s28
      %s45 = sphi 0, %s29
      %s49 = sphi 0, %s49
      %s51 = sphi 0, %s49
      %s52 = sphi 0, %s51
      %s66 = sphi 0, %s52
      %s72 = sphi 0, %s74
      %s75 = sphi 0, %s72
      %s76 = sphi 0, %s75
      %s92 = sphi 0, %s76
    $region4: #{tpu_custom_call.1} parent=1 // loop_header_branch
      %18 = sbr.rel (%p16) target = $region8
    $region5: #{tpu_custom_call.1} parent=1 // loop_body
      %s20 = ssub.s32 %s15, 1
      %s21 = ssub.s32 %s15, 2
      %s22 = sadd.s32 %s15, 1
      %s23 = ssub.s32 %s15, %s22
      %p24 = scmp.eq.s32.totalorder %s23, 0
      %s26 = sadd.s32 %s25, 1
      %s27 = scalar_select %p24, %s25, %s26
      %p30 = pneg %p24
      %p31 = scmp.eq.s32.totalorder %s15, 1
      %p32 = por %p30, %p31
      %p33 = scmp.ne.s32.totalorder %s25, %s28
      %p34 = scmp.eq.s32.totalorder %s15, 0
      %p35 = por %p33, %p34
      %p36 = scmp.ne.s32.totalorder %s25, %s28
      %p37 = scmp.eq.s32.totalorder %s20, 1
      %p38 = por %p36, %p37
      %p39 = scmp.ne.s32.totalorder %s28, %s29
      %p40 = scmp.eq.s32.totalorder %s20, 0
      %p41 = por %p39, %p40
      %p42 = scmp.ne.s32.totalorder %s28, %s29
      %p43 = scmp.eq.s32.totalorder %s21, 1
      %p44 = por %p42, %p43
      %p46 = scmp.ne.s32.totalorder %s29, %s45
      %p47 = scmp.eq.s32.totalorder %s21, 0
      %p48 = por %p46, %p47
      %s50 = sadd.s32 %s49, 1
      %p53 = scmp.eq.s32.totalorder %s15, 1
      %p54 = scmp.ne.s32.totalorder %s49, %s51
      %p55 = scmp.eq.s32.totalorder %s15, 0
      %p56 = por %p54, %p55
      %p57 = scmp.ne.s32.totalorder %s49, %s51
      %p58 = scmp.eq.s32.totalorder %s20, 1
      %p59 = por %p57, %p58
      %p60 = scmp.ne.s32.totalorder %s51, %s52
      %p61 = scmp.eq.s32.totalorder %s20, 0
      %p62 = por %p60, %p61
      %p63 = scmp.ne.s32.totalorder %s51, %s52
      %p64 = scmp.eq.s32.totalorder %s21, 1
      %p65 = por %p63, %p64
      %p67 = scmp.ne.s32.totalorder %s52, %s66
      %p68 = scmp.eq.s32.totalorder %s21, 0
      %p69 = por %p67, %p68
      %s70 = ssub.s32 %s15, %s22
      %p71 = scmp.eq.s32.totalorder %s70, 0
      %s73 = sadd.s32 %s72, 1
      %s74 = scalar_select %p71, %s72, %s73
      %p77 = pneg %p71
      %p78 = scmp.eq.s32.totalorder %s15, 1
      %p79 = por %p77, %p78
      %p80 = scmp.ne.s32.totalorder %s72, %s75
      %p81 = scmp.eq.s32.totalorder %s15, 0
      %p82 = por %p80, %p81
      %p83 = scmp.ne.s32.totalorder %s72, %s75
      %p84 = scmp.eq.s32.totalorder %s20, 1
      %p85 = por %p83, %p84
      %p86 = scmp.ne.s32.totalorder %s75, %s76
      %p87 = scmp.eq.s32.totalorder %s20, 0
      %p88 = por %p86, %p87
      %p89 = scmp.ne.s32.totalorder %s75, %s76
      %p90 = scmp.eq.s32.totalorder %s21, 1
      %p91 = por %p89, %p90
      %p93 = scmp.ne.s32.totalorder %s76, %s92
      %p94 = scmp.eq.s32.totalorder %s21, 0
      %p95 = por %p93, %p94
      %p96 = scmp.le.s32.totalorder 1, %s15
      %p97 = scmp.lt.s32.totalorder %s15, 3
      %p98 = pnand %p96, %p97
      %p99 = pneg %p98
      // Predicated region
      $region9: #{tpu_custom_call.1} parent=5 // pred_check
        _
      $region10: #{tpu_custom_call.1} parent=5 // pred_check_branch
        %101 = sbr.rel (%p98) target = $region12
      $region11: #{tpu_custom_call.1} parent=5 // pred_region
        %s102 = ssub.s32 %s15, 1
        // Predicated region
        $region13: #{tpu_custom_call.1} parent=11 // pred_check
          %p103 = pneg %p62
        $region14: #{tpu_custom_call.1} parent=11 // pred_check_branch
          %105 = sbr.rel (%p103) target = $region16
        $region15: #{tpu_custom_call.1} parent=11 // pred_region
          %s107 = ssub.s32 128, 128
          %108 = vsyncadd [#allocation6], %s107
          %s110 = sshll.u32 [#allocation5], 4
          %s111 = int_to_ptr.vmem [resolvable:$true] %s110
          %113 = dma.hbm_to_vmem [thread:$0]  %s1, 128, %s111, [#allocation6]
        $region16: #{tpu_custom_call.1} parent=11 // pred_fallthru
          _
      $region12: #{tpu_custom_call.1} parent=5 // pred_fallthru
        _
      %p114 = scmp.lt.s32.totalorder %s15, 2
      // Predicated region
      $region17: #{tpu_custom_call.1} parent=5 // pred_check
        %p115 = pneg %p114
      $region18: #{tpu_custom_call.1} parent=5 // pred_check_branch
        %117 = sbr.rel (%p115) target = $region20
      $region19: #{tpu_custom_call.1} parent=5 // pred_region
        // Predicated region
        $region21: #{tpu_custom_call.1} parent=19 // pred_check
          %p118 = pneg %p35
        $region22: #{tpu_custom_call.1} parent=19 // pred_check_branch
          %120 = sbr.rel (%p118) target = $region24
        $region23: #{tpu_custom_call.1} parent=19 // pred_region
          %s121 = sand.u32 %s25, 1
          %s122 = scalar_lea.sflag [#allocation3], %s121
          %s123 = sand.u32 %s25, 1
          %s124 = smul.addr %s123, 128
          %s125 = scalar_lea.vmem [#allocation2], %s124
          %s126 = smul.u32 16, %s15
          %s128 = ssub.s32 2048, 2048
          %129 = vsyncadd %s122, %s128
          %s130 = smul.addr %s126, 2
          %s131 = smul.addr %s130, 64
          %s132 = scalar_lea.hbm %s0, %s131
          %s133 = sshll.u32 %s125, 4
          %s134 = int_to_ptr.vmem [resolvable:$true] %s133
          %139 = dma.hbm_to_vmem [thread:$0]  %s132, 2048, %s134, %s122, 128, 128, 8
        $region24: #{tpu_custom_call.1} parent=19 // pred_fallthru
          _
      $region20: #{tpu_custom_call.1} parent=5 // pred_fallthru
        _
      %p140 = scmp.le.s32.totalorder 1, %s15
      %p141 = scmp.lt.s32.totalorder %s15, 3
      %p142 = pnand %p140, %p141
      %p143 = pneg %p142
      // Predicated region
      $region25: #{tpu_custom_call.1} parent=5 // pred_check
        _
      $region26: #{tpu_custom_call.1} parent=5 // pred_check_branch
        %145 = sbr.rel (%p142) target = $region28
      $region27: #{tpu_custom_call.1} parent=5 // pred_region
        %s146 = ssub.s32 %s15, 1
        %s147 = sand.u32 %s28, 1
        %s148 = scalar_lea.sflag [#allocation3], %s147
        %s149 = sand.u32 %s28, 1
        %s150 = smul.addr %s149, 128
        %s151 = scalar_lea.vmem [#allocation2], %s150
        // Predicated region
        $region29: #{tpu_custom_call.1} parent=27 // pred_check
          %p152 = pneg %p41
        $region30: #{tpu_custom_call.1} parent=27 // pred_check_branch
          %154 = sbr.rel (%p152) target = $region32
        $region31: #{tpu_custom_call.1} parent=27 // pred_region
          %155 = dma.done %s148, 2048
        $region32: #{tpu_custom_call.1} parent=27 // pred_fallthru
          _
        // Predicated region
        $region33: #{tpu_custom_call.1} parent=27 // pred_check
          %p156 = pneg %p62
        $region34: #{tpu_custom_call.1} parent=27 // pred_check_branch
          %158 = sbr.rel (%p156) target = $region36
        $region35: #{tpu_custom_call.1} parent=27 // pred_region
          %159 = dma.done [#allocation6], 128
        $region36: #{tpu_custom_call.1} parent=27 // pred_fallthru
          _
        %s160 = sand.u32 %s28, 1
        %s161 = scalar_lea.sflag [#allocation3], %s160
        %s162 = sand.u32 %s28, 1
        %s163 = smul.addr %s162, 128
        %s164 = scalar_lea.vmem [#allocation2], %s163
        %p165 = pneg %p41
        %p166 = pneg %p38
        %p167 = pneg %p62
        %p168 = pneg %p59
        %p169 = pneg %p88
        %p170 = pneg %p85
        %s171 = sand.u32 %s75, 1
        %s172 = scalar_lea.sflag [#allocation4], %s171
        %s173 = sand.u32 %s75, 1
        %s174 = smul.addr %s173, 8
        %s175 = scalar_lea.vmem [#allocation7], %s174
        %s176 = smul.u32 16, %s20
        %v178 = vld [vmem:[#allocation5] sm:$0xff]
        %v179 = vld [vmem:[%s151] sm:$0xff]
        %v180 = vld [vmem:[%s151 + $0x8] sm:$0xff]
        %v181 = vld [vmem:[%s151 + $0x10] sm:$0xff]
        %v182 = vld [vmem:[%s151 + $0x18] sm:$0xff]
        %v183 = vld [vmem:[%s151 + $0x20] sm:$0xff]
        %v184 = vld [vmem:[%s151 + $0x28] sm:$0xff]
        %v185 = vld [vmem:[%s151 + $0x30] sm:$0xff]
        %v186 = vld [vmem:[%s151 + $0x38] sm:$0xff]
        %v187 = vld [vmem:[%s151 + $0x40] sm:$0xff]
        %v188 = vld [vmem:[%s151 + $0x48] sm:$0xff]
        %v189 = vld [vmem:[%s151 + $0x50] sm:$0xff]
        %v190 = vld [vmem:[%s151 + $0x58] sm:$0xff]
        %v191 = vld [vmem:[%s151 + $0x60] sm:$0xff]
        %v192 = vld [vmem:[%s151 + $0x68] sm:$0xff]
        %v193 = vld [vmem:[%s151 + $0x70] sm:$0xff]
        %v194 = vld [vmem:[%s151 + $0x78] sm:$0xff]
        %v196 = vunpack.c.l.b16 %v178
        %v197 = vunpack.c.h.b16 %v178
        %v198 = vpack.c.b16 %v196, %v196
        %v199 = vpack.c.b16 %v197, %v197
        %v218 = vunpack.c.l.b16 %v179
        %v219 = vunpack.c.h.b16 %v179
        %v220 = vunpack.c.l.b16 %v180
        %v221 = vunpack.c.h.b16 %v180
        %v222 = vunpack.c.l.b16 %v181
        %v223 = vunpack.c.h.b16 %v181
        %v224 = vunpack.c.l.b16 %v182
        %v225 = vunpack.c.h.b16 %v182
        %v226 = vunpack.c.l.b16 %v183
        %v227 = vunpack.c.h.b16 %v183
        %v228 = vunpack.c.l.b16 %v184
        %v229 = vunpack.c.h.b16 %v184
        %v230 = vunpack.c.l.b16 %v185
        %v231 = vunpack.c.h.b16 %v185
        %v232 = vunpack.c.l.b16 %v186
        %v233 = vunpack.c.h.b16 %v186
        %v234 = vunpack.c.l.b16 %v187
        %v235 = vunpack.c.h.b16 %v187
        %v236 = vunpack.c.l.b16 %v188
        %v237 = vunpack.c.h.b16 %v188
        %v238 = vunpack.c.l.b16 %v189
        %v239 = vunpack.c.h.b16 %v189
        %v240 = vunpack.c.l.b16 %v190
        %v241 = vunpack.c.h.b16 %v190
        %v242 = vunpack.c.l.b16 %v191
        %v243 = vunpack.c.h.b16 %v191
        %v244 = vunpack.c.l.b16 %v192
        %v245 = vunpack.c.h.b16 %v192
        %v246 = vunpack.c.l.b16 %v193
        %v247 = vunpack.c.h.b16 %v193
        %v248 = vunpack.c.l.b16 %v194
        %v249 = vunpack.c.h.b16 %v194
        %v250 = vpack.c.b16 %v220, %v218
        %v251 = vpack.c.b16 %v221, %v219
        %v252 = vpack.c.b16 %v224, %v222
        %v253 = vpack.c.b16 %v225, %v223
        %v254 = vpack.c.b16 %v228, %v226
        %v255 = vpack.c.b16 %v229, %v227
        %v256 = vpack.c.b16 %v232, %v230
        %v257 = vpack.c.b16 %v233, %v231
        %v258 = vpack.c.b16 %v236, %v234
        %v259 = vpack.c.b16 %v237, %v235
        %v260 = vpack.c.b16 %v240, %v238
        %v261 = vpack.c.b16 %v241, %v239
        %v262 = vpack.c.b16 %v244, %v242
        %v263 = vpack.c.b16 %v245, %v243
        %v264 = vpack.c.b16 %v248, %v246
        %v265 = vpack.c.b16 %v249, %v247
        %282 = vmatprep.subr.bf16.mxu0 %v265
        %283 = vmatpush1.bf16.xpose.msra.mxu0 %v264
        %284 = vmatprep.subr.bf16.mxu0 %v263
        %285 = vmatpush1.bf16.xpose.msra.mxu0 %v262
        %286 = vmatprep.subr.bf16.mxu0 %v261
        %287 = vmatpush1.bf16.xpose.msra.mxu0 %v260
        %288 = vmatprep.subr.bf16.mxu0 %v259
        %289 = vmatpush1.bf16.xpose.msra.mxu0 %v258
        %290 = vmatprep.subr.bf16.mxu0 %v257
        %291 = vmatpush1.bf16.xpose.msra.mxu0 %v256
        %292 = vmatprep.subr.bf16.mxu0 %v255
        %293 = vmatpush1.bf16.xpose.msra.mxu0 %v254
        %294 = vmatprep.subr.bf16.mxu0 %v253
        %295 = vmatpush1.bf16.xpose.msra.mxu0 %v252
        %296 = vmatprep.subr.bf16.mxu0 %v251
        %297 = vmatpush1.bf16.xpose.msra.mxu0 %v250
        %298 = vmatprep.subr.bf16.mxu0 0
        %299 = vmatpush2.bf16.xpose.msra.mxu0 0
        %300 = vmatprep.subr.bf16.mxu0 0
        %301 = vmatpush2.bf16.xpose.msra.mxu0 0
        %302 = vmatprep.subr.bf16.mxu0 0
        %303 = vmatpush2.bf16.xpose.msra.mxu0 0
        %304 = vmatprep.subr.bf16.mxu0 0
        %305 = vmatpush2.bf16.xpose.msra.mxu0 0
        %306 = vmatprep.subr.bf16.mxu0 0
        %307 = vmatpush2.bf16.xpose.msra.mxu0 0
        %308 = vmatprep.subr.bf16.mxu0 0
        %309 = vmatpush2.bf16.xpose.msra.mxu0 0
        %310 = vmatprep.subr.bf16.mxu0 0
        %311 = vmatpush2.bf16.xpose.msra.mxu0 0
        %312 = vmatprep.subr.bf16.mxu0 0
        %313 = vmatpush2.bf16.xpose.msra.mxu0 0
        %314 = vmatprep.mubr.bf16.mxu0 %v199
        %315 = vmatmul.mubr.bf16.gmra.mxu0 %v198
        %v316 = vpop.f32.mrf.mxu0
        %v317 = vadd.f32 0.0, %v316
        %v318 = vpop.f32.mrf.mxu0
        %v319 = vpop.f32.mrf.mxu0
        %v320 = vpop.f32.mrf.mxu0
        %321 = vdwg.mxu0
        %v322 = vrot.slane %v317, 4
        %v323 = vmax.f32 %v317, %v322
        %v324 = vrot.slane %v323, 2
        %v325 = vmax.f32 %v323, %v324
        %v326 = vrot.slane %v325, 1
        %v327 = vmax.f32 %v325, %v326
        %v328 = vsub.f32 %v317, %v327
        %v329 = vmul.f32 %v328, 1.442695
        %v330 = vpow.pop %v329
        %v331 = vrot.slane %v330, 4
        %v332 = vadd.f32 %v330, %v331
        %v333 = vrot.slane %v332, 2
        %v334 = vadd.f32 %v332, %v333
        %v335 = vrot.slane %v334, 1
        %v336 = vadd.f32 %v334, %v335
        %v337 = vrcp.pop %v336
        %v338 = vmul.f32 %v330, %v337
        %339 = vst [vmem:[%s175] sm:$0xff] %v338
        %s340 = sand.u32 %s75, 1
        %s341 = scalar_lea.sflag [#allocation4], %s340
        %s342 = sand.u32 %s75, 1
        %s343 = smul.addr %s342, 8
        %s344 = scalar_lea.vmem [#allocation7], %s343
        // Predicated region
        $region37: #{tpu_custom_call.1} parent=27 // pred_check
          %p345 = pneg %p85
        $region38: #{tpu_custom_call.1} parent=27 // pred_check_branch
          %347 = sbr.rel (%p345) target = $region40
        $region39: #{tpu_custom_call.1} parent=27 // pred_region
          %s349 = ssub.s32 128, 128
          %350 = vsyncadd %s341, %s349
          %s351 = smul.addr %s20, 128
          %s352 = scalar_lea.hbm %s2, %s351
          %s354 = sshll.u32 %s344, 4
          %s355 = int_to_ptr.vmem [resolvable:$true] %s354
          %357 = dma.vmem_to_hbm [thread:$0]  %s355, 128, %s352, %s341
        $region40: #{tpu_custom_call.1} parent=27 // pred_fallthru
          _
      $region28: #{tpu_custom_call.1} parent=5 // pred_fallthru
        _
      %p358 = scmp.le.s32.totalorder 2, %s15
      // Predicated region
      $region41: #{tpu_custom_call.1} parent=5 // pred_check
        %p359 = pneg %p358
      $region42: #{tpu_custom_call.1} parent=5 // pred_check_branch
        %361 = sbr.rel (%p359) target = $region44
      $region43: #{tpu_custom_call.1} parent=5 // pred_region
        %s362 = ssub.s32 %s15, 2
        // Predicated region
        $region45: #{tpu_custom_call.1} parent=43 // pred_check
          %p363 = pneg %p91
        $region46: #{tpu_custom_call.1} parent=43 // pred_check_branch
          %365 = sbr.rel (%p363) target = $region48
        $region47: #{tpu_custom_call.1} parent=43 // pred_region
          %s366 = sand.u32 %s76, 1
          %s367 = scalar_lea.sflag [#allocation4], %s366
          %s368 = sand.u32 %s76, 1
          %s369 = smul.addr %s368, 8
          %s370 = scalar_lea.vmem [#allocation7], %s369
          %371 = dma.done %s367, 128
        $region48: #{tpu_custom_call.1} parent=43 // pred_fallthru
          _
      $region44: #{tpu_custom_call.1} parent=5 // pred_fallthru
        _
    $region6: #{tpu_custom_call.1} parent=1 // loop_footer
      %s19 = sadd.s32 1, %s15
    $region7: #{tpu_custom_call.1} parent=1 // loop_footer_branch
      %14 = sbr.rel target = $region3
    $region8: #{tpu_custom_call.1} parent=1 // loop_exit
      _
    %372 = vsyncpa [#allocation3], 1
    %s373 = scalar_lea.sflag [#allocation3], 1
    %374 = vsyncpa %s373, 1
    %375 = vsyncpa [#allocation6], 1
    %376 = vsyncpa [#allocation4], 1
    %s377 = scalar_lea.sflag [#allocation4], 1
    %378 = vsyncpa %s377, 1

</llo_original>
